<compile_context>
chip_gen: v6e
topology: v6e:2x2x1
jax: 0.10.0
libtpu: 0.0.40
codegen_flags: <defaults>
</compile_context>

<pallas_src>
import functools

import jax
import jax.numpy as jnp
import numpy as np
from jax.experimental import pallas as pl
from jax.experimental.pallas import tpu as pltpu


# ----------------------------------------------------------------------------
# helpers
# ----------------------------------------------------------------------------
def _round_up(x, m):
    return ((x + m - 1) // m) * m


# tile heuristics: 256 tiles only when the dimension is big enough to feed a
# 2x256x256 MXU (v6e/v7x); small dims stay at 128 (also correct/optimal on v5e).
def _tile_m(M):
    return 256 if M >= 512 else 128


def _tile_n(N):
    return 256 if N >= 512 else 128


def _tile_k(K):
    Kp = _round_up(K, 128)
    return Kp if Kp <= 512 else 512          # small K: single K block (no k grid axis)


# ----------------------------------------------------------------------------
# Pallas kernel 1: fused matmul + bias + activation (the conv / linear hot path)
#   bf16 A/B inputs, fp32 accumulation, fp32 epilogue.
# ----------------------------------------------------------------------------
def _apply_act(y, act):
    if act == "relu":
        y = jnp.maximum(y, 0.0)
    elif act == "hardswish":
        y = y * jnp.clip(y + 3.0, 0.0, 6.0) * (1.0 / 6.0)
    return y


def _mm_single_k_kernel(a_ref, b_ref, bias_ref, o_ref, *, act):
    # whole K in one block -> no scratch accumulator, no init/finalize branches
    y = jnp.dot(a_ref[...], b_ref[...], preferred_element_type=jnp.float32)
    y = y + bias_ref[...]
    o_ref[...] = _apply_act(y, act).astype(o_ref.dtype)


def _mm_multi_k_kernel(a_ref, b_ref, bias_ref, o_ref, acc_ref, *, act):
    k = pl.program_id(2)

    @pl.when(k == 0)
    def _():
        acc_ref[...] = jnp.zeros_like(acc_ref)

    acc_ref[...] += jnp.dot(a_ref[...], b_ref[...],
                            preferred_element_type=jnp.float32)

    @pl.when(k == pl.num_programs(2) - 1)
    def _():
        y = acc_ref[...] + bias_ref[...]
        o_ref[...] = _apply_act(y, act).astype(o_ref.dtype)


def prep_matmul(w_mat, bias):
    """Pre-pad + bf16-cast a (K, N) weight matrix and (N,) bias ONCE."""
    w_mat = jnp.asarray(w_mat, jnp.float32)
    bias = jnp.asarray(bias, jnp.float32)
    K, N = w_mat.shape
    tk, tn = _tile_k(K), _tile_n(N)
    Kp, Np = _round_up(K, tk), _round_up(N, tn)
    wp = jnp.zeros((Kp, Np), jnp.bfloat16).at[:K, :N].set(w_mat.astype(jnp.bfloat16))
    bp = jnp.zeros((1, Np), jnp.float32).at[0, :N].set(bias)
    return {"w": wp, "b": bp, "K": K, "N": N, "tk": tk, "tn": tn}


def matmul_bias_act(a, wb, act="none"):
    """a:(M,K) fp32 @ pre-padded bf16 weights + bias, fused activation."""
    M, K = a.shape
    assert K == wb["K"], (K, wb["K"])
    wp, bp = wb["w"], wb["b"]
    Kp, Np = wp.shape
    tk, tn = wb["tk"], wb["tn"]
    tm = _tile_m(M)
    Mp = _round_up(M, tm)
    a_p = jnp.zeros((Mp, Kp), jnp.bfloat16).at[:M, :K].set(a.astype(jnp.bfloat16))
    nk = Kp // tk

    if nk == 1:
        out = pl.pallas_call(
            functools.partial(_mm_single_k_kernel, act=act),
            out_shape=jax.ShapeDtypeStruct((Mp, Np), jnp.float32),
            grid_spec=pltpu.PrefetchScalarGridSpec(
                num_scalar_prefetch=0,
                grid=(Mp // tm, Np // tn),
                in_specs=[
                    pl.BlockSpec((tm, Kp), lambda i, j: (i, 0)),
                    pl.BlockSpec((Kp, tn), lambda i, j: (0, j)),
                    pl.BlockSpec((1, tn), lambda i, j: (0, j)),
                ],
                out_specs=pl.BlockSpec((tm, tn), lambda i, j: (i, j)),
            ),
            compiler_params=pltpu.CompilerParams(
                dimension_semantics=("parallel", "parallel")),
        )(a_p, wp, bp)
    else:
        out = pl.pallas_call(
            functools.partial(_mm_multi_k_kernel, act=act),
            out_shape=jax.ShapeDtypeStruct((Mp, Np), jnp.float32),
            grid_spec=pltpu.PrefetchScalarGridSpec(
                num_scalar_prefetch=0,
                grid=(Mp // tm, Np // tn, nk),
                in_specs=[
                    pl.BlockSpec((tm, tk), lambda i, j, k: (i, k)),
                    pl.BlockSpec((tk, tn), lambda i, j, k: (k, j)),
                    pl.BlockSpec((1, tn), lambda i, j, k: (0, j)),
                ],
                out_specs=pl.BlockSpec((tm, tn), lambda i, j, k: (i, j)),
                scratch_shapes=[pltpu.VMEM((tm, tn), jnp.float32)],
            ),
            compiler_params=pltpu.CompilerParams(
                dimension_semantics=("parallel", "parallel", "arbitrary")),
        )(a_p, wp, bp)

    if Mp == M and Np == wb["N"]:
        return out                      # avoid the slice copy when already exact
    return out[:M, :wb["N"]]


# ----------------------------------------------------------------------------
# Pallas kernel 2: elementwise affine (image normalization), tiled over lanes
# ----------------------------------------------------------------------------
def _affine_kernel(x_ref, s_ref, b_ref, o_ref):
    o_ref[...] = x_ref[...] * s_ref[...] + b_ref[...]


def normalize_nchw(x, mean, std):
    """(x - mean) / std per channel, NCHW, Pallas elementwise kernel (lane-tiled)."""
    N, C, H, W = x.shape
    rows, cols = N * C, H * W
    Rp, Cp = _round_up(rows, 8), _round_up(cols, 128)

    xf = jnp.zeros((Rp, Cp), jnp.float32).at[:rows, :cols].set(
        x.reshape(rows, cols))
    scale = jnp.tile(1.0 / std, N)
    shift = jnp.tile(-mean / std, N)
    s_p = jnp.zeros((Rp, 1), jnp.float32).at[:rows, 0].set(scale)
    b_p = jnp.zeros((Rp, 1), jnp.float32).at[:rows, 0].set(shift)

    tile_c = 128
    for cand in (2048, 1024, 512, 256, 128):
        if Cp % cand == 0:
            tile_c = cand
            break

    out = pl.pallas_call(
        _affine_kernel,
        out_shape=jax.ShapeDtypeStruct((Rp, Cp), jnp.float32),
        grid=(Cp // tile_c,),
        in_specs=[
            pl.BlockSpec((Rp, tile_c), lambda i: (0, i)),
            pl.BlockSpec((Rp, 1), lambda i: (0, 0)),
            pl.BlockSpec((Rp, 1), lambda i: (0, 0)),
        ],
        out_specs=pl.BlockSpec((Rp, tile_c), lambda i: (0, i)),
    )(xf, s_p, b_p)
    return out[:rows, :cols].reshape(N, C, H, W)


# ----------------------------------------------------------------------------
# conv2d via NHWC im2col + Pallas matmul   (glue: patch extraction / reshapes)
# ----------------------------------------------------------------------------
def _im2col_nhwc(x, kh, kw, stride, padding):
    N, H, W, C = x.shape
    Ho = (H + 2 * padding - kh) // stride + 1
    Wo = (W + 2 * padding - kw) // stride + 1
    xp = jnp.pad(x, ((0, 0), (padding, padding), (padding, padding), (0, 0)))
    cols = []
    for i in range(kh):
        for j in range(kw):
            cols.append(xp[:, i:i + stride * Ho:stride,
                               j:j + stride * Wo:stride, :])   # (N,Ho,Wo,C)
    a = jnp.concatenate(cols, axis=-1).reshape(N * Ho * Wo, kh * kw * C)
    return a, Ho, Wo


def conv2d_nhwc(x, wb, stride=1, padding=0, act="none"):
    """x:(N,H,W,Cin) NHWC, prepped conv weights -> (N,Ho,Wo,Cout) NHWC."""
    N = x.shape[0]
    kh, kw = wb["kh"], wb["kw"]
    if kh == 1 and kw == 1 and padding == 0:
        if stride > 1:
            x = x[:, ::stride, ::stride, :]
        _, Ho, Wo, C = x.shape
        a = x.reshape(N * Ho * Wo, C)                           # no im2col for 1x1
    else:
        a, Ho, Wo = _im2col_nhwc(x, kh, kw, stride, padding)
    y = matmul_bias_act(a, wb, act=act)
    return y.reshape(N, Ho, Wo, wb["N"])


# ----------------------------------------------------------------------------
# parameter construction (deterministic, synthetic; BN folded; pre-padded bf16)
# ----------------------------------------------------------------------------
def _init_conv_bn(key, cout, cin, kh, kw, eps=1e-5):
    k1, k2, k3, k4, k5 = jax.random.split(key, 5)
    w = jax.random.normal(k1, (cout, cin, kh, kw), jnp.float32) / np.sqrt(cin * kh * kw)
    gamma = 1.0 + 0.01 * jax.random.normal(k2, (cout,), jnp.float32)
    beta = 0.01 * jax.random.normal(k3, (cout,), jnp.float32)
    mean = 0.01 * jax.random.normal(k4, (cout,), jnp.float32)
    var = 1.0 + jnp.abs(0.01 * jax.random.normal(k5, (cout,), jnp.float32))
    scale = gamma / jnp.sqrt(var + eps)
    return w * scale[:, None, None, None], beta - mean * scale


def _init_conv(key, cout, cin, kh, kw):
    k1, k2 = jax.random.split(key)
    w = jax.random.normal(k1, (cout, cin, kh, kw), jnp.float32) / np.sqrt(cin * kh * kw)
    b = 0.01 * jax.random.normal(k2, (cout,), jnp.float32)
    return w, b


def _init_linear(key, nout, nin):
    k1, k2 = jax.random.split(key)
    w = jax.random.normal(k1, (nout, nin), jnp.float32) / np.sqrt(nin)
    b = 0.01 * jax.random.normal(k2, (nout,), jnp.float32)
    return w, b


def prep_conv(w, b):
    """(Cout,Cin,kh,kw) torch-style conv weight -> prepped (kh*kw*Cin, Cout) matmul."""
    Cout, Cin, kh, kw = w.shape
    w_mat = jnp.transpose(w, (2, 3, 1, 0)).reshape(kh * kw * Cin, Cout)
    wb = prep_matmul(w_mat, b)
    wb["kh"], wb["kw"] = kh, kw
    return wb


def prep_linear(w, b):
    """(Nout, Nin) torch-style linear weight -> prepped (Nin, Nout) matmul."""
    return prep_matmul(jnp.asarray(w).T, b)


# small-scale config (real model: fpn_ch=256, rep=1024, img 320)
FPN_CH = 32
REP_SIZE = 64
NUM_CLASSES = 5
NUM_ANCHORS = 15            # (5 sizes x 3 aspect ratios) per location, as in torchvision
ROI_OUT = 7


def build_params(key):
    keys = jax.random.split(key, 20)
    p = {}
    # backbone (MobileNetV3-style conv-bn-act stack; strides 2,1,2,2,2)
    p["stem"] = prep_conv(*_init_conv_bn(keys[0], 16, 3, 3, 3))
    p["blk1"] = prep_conv(*_init_conv_bn(keys[1], 16, 16, 3, 3))
    p["blk2"] = prep_conv(*_init_conv_bn(keys[2], 24, 16, 3, 3))
    p["blk3"] = prep_conv(*_init_conv_bn(keys[3], 40, 24, 3, 3))   # -> feature "0"
    p["blk4"] = prep_conv(*_init_conv_bn(keys[4], 80, 40, 3, 3))   # -> feature "1"
    # FPN
    p["lat0"] = prep_conv(*_init_conv(keys[5], FPN_CH, 40, 1, 1))
    p["lat1"] = prep_conv(*_init_conv(keys[6], FPN_CH, 80, 1, 1))
    p["out0"] = prep_conv(*_init_conv(keys[7], FPN_CH, FPN_CH, 3, 3))
    p["out1"] = prep_conv(*_init_conv(keys[8], FPN_CH, FPN_CH, 3, 3))
    # RPN head (shared across levels); cls + bbox 1x1 heads fused into one matmul
    p["rpn_conv"] = prep_conv(*_init_conv(keys[9], FPN_CH, FPN_CH, 3, 3))
    wc, bc = _init_conv(keys[10], NUM_ANCHORS, FPN_CH, 1, 1)
    wbb, bbb = _init_conv(keys[11], NUM_ANCHORS * 4, FPN_CH, 1, 1)
    p["rpn_heads"] = prep_conv(jnp.concatenate([wc, wbb], axis=0),
                               jnp.concatenate([bc, bbb], axis=0))
    # box head + fused predictor (cls_score + bbox_pred)
    p["fc6"] = prep_linear(*_init_linear(keys[12], REP_SIZE, FPN_CH * ROI_OUT * ROI_OUT))
    p["fc7"] = prep_linear(*_init_linear(keys[13], REP_SIZE, REP_SIZE))
    wcs, bcs = _init_linear(keys[14], NUM_CLASSES, REP_SIZE)
    wbp, bbp = _init_linear(keys[15], NUM_CLASSES * 4, REP_SIZE)
    p["predictor"] = prep_linear(jnp.concatenate([wcs, wbp], axis=0),
                                 jnp.concatenate([bcs, bbp], axis=0))
    return p


# ----------------------------------------------------------------------------
# simplified RoIAlign (glue: data-dependent bilinear gather, no Pallas equivalent)
# ----------------------------------------------------------------------------
def _bilinear_sample(feat, ys, xs):
    # feat: (C,H,W); ys, xs: (P,)
    H, W = feat.shape[1], feat.shape[2]
    y0 = jnp.floor(ys).astype(jnp.int32)
    x0 = jnp.floor(xs).astype(jnp.int32)
    y1, x1 = y0 + 1, x0 + 1
    wy, wx = ys - y0, xs - x0
    y0c, y1c = jnp.clip(y0, 0, H - 1), jnp.clip(y1, 0, H - 1)
    x0c, x1c = jnp.clip(x0, 0, W - 1), jnp.clip(x1, 0, W - 1)
    v00 = feat[:, y0c, x0c]
    v01 = feat[:, y0c, x1c]
    v10 = feat[:, y1c, x0c]
    v11 = feat[:, y1c, x1c]
    return (v00 * (1 - wy) * (1 - wx) + v01 * (1 - wy) * wx +
            v10 * wy * (1 - wx) + v11 * wy * wx)


def roi_align(feat, boxes, batch_idx, spatial_scale, out_size=ROI_OUT):
    def one(box, bi):
        f = feat[bi]
        x1, y1, x2, y2 = box * spatial_scale
        ys = y1 + (jnp.arange(out_size, dtype=jnp.float32) + 0.5) * (y2 - y1) / out_size
        xs = x1 + (jnp.arange(out_size, dtype=jnp.float32) + 0.5) * (x2 - x1) / out_size
        yy, xx = jnp.meshgrid(ys, xs, indexing="ij")
        v = _bilinear_sample(f, yy.reshape(-1), xx.reshape(-1))
        return v.reshape(f.shape[0], out_size, out_size)

    return jax.vmap(one)(boxes, batch_idx)


# ----------------------------------------------------------------------------
# forward pass
# ----------------------------------------------------------------------------
IMAGE_MEAN = jnp.array([0.485, 0.456, 0.406], jnp.float32)
IMAGE_STD = jnp.array([0.229, 0.224, 0.225], jnp.float32)


def forward(params, x):
    N, _, H, W = x.shape

    # --- transform: normalize (resize to 320 omitted, see TODO above) ---
    x = normalize_nchw(x, IMAGE_MEAN, IMAGE_STD)
    x = jnp.transpose(x, (0, 2, 3, 1))          # NCHW -> NHWC (internal layout)

    # --- backbone ---
    h = conv2d_nhwc(x, params["stem"], stride=2, padding=1, act="hardswish")
    h = conv2d_nhwc(h, params["blk1"], stride=1, padding=1, act="relu")
    h = conv2d_nhwc(h, params["blk2"], stride=2, padding=1, act="relu")
    c0 = conv2d_nhwc(h, params["blk3"], stride=2, padding=1, act="hardswish")   # stride 8
    c1 = conv2d_nhwc(c0, params["blk4"], stride=2, padding=1, act="hardswish")  # stride 16

    # --- FPN ---
    l0 = conv2d_nhwc(c0, params["lat0"])
    l1 = conv2d_nhwc(c1, params["lat1"])
    td = jnp.repeat(jnp.repeat(l1, 2, axis=1), 2, axis=2)    # nearest upsample x2
    p0 = conv2d_nhwc(l0 + td, params["out0"], stride=1, padding=1)
    p1 = conv2d_nhwc(l1, params["out1"], stride=1, padding=1)
    ppool = p1[:, ::2, ::2, :]                               # LastLevelMaxPool (k=1, s=2)
    fpn = {"0": p0, "1": p1, "pool": ppool}

    # --- RPN head (shared weights across levels; cls+bbox fused 1x1) ---
    na = NUM_ANCHORS
    rpn_cls, rpn_bbox = {}, {}
    for lvl, feat in fpn.items():
        t = conv2d_nhwc(feat, params["rpn_conv"], stride=1, padding=1, act="relu")
        heads = conv2d_nhwc(t, params["rpn_heads"])          # (N,Ho,Wo, 15+60)
        rpn_cls[lvl] = jnp.transpose(heads[..., :na], (0, 3, 1, 2))
        rpn_bbox[lvl] = jnp.transpose(heads[..., na:], (0, 3, 1, 2))

    # FPN features back to NCHW at the module boundary
    fpn_nchw = {k: jnp.transpose(v, (0, 3, 1, 2)) for k, v in fpn.items()}

    # --- RoI heads (fixed proposals; NMS / anchor decode omitted, see TODO) ---
    base_boxes = jnp.array(
        [[0.0, 0.0, W - 1.0, H - 1.0],
         [0.0, 0.0, W / 2 - 1.0, H / 2 - 1.0],
         [W / 2, 0.0, W - 1.0, H / 2 - 1.0],
         [0.0, H / 2, W / 2 - 1.0, H - 1.0],
         [W / 2, H / 2, W - 1.0, H - 1.0]], jnp.float32)
    boxes = jnp.concatenate([base_boxes] * N, axis=0)
    batch_idx = jnp.repeat(jnp.arange(N, dtype=jnp.int32), base_boxes.shape[0])

    p0_nchw = fpn_nchw["0"]
    spatial_scale = p0_nchw.shape[2] / H       # single-level RoIAlign (level "0")
    pooled = roi_align(p0_nchw, boxes, batch_idx, spatial_scale)      # (R, C, 7, 7)
    flat = pooled.reshape(pooled.shape[0], -1)

    rep = matmul_bias_act(flat, params["fc6"], act="relu")
    rep = matmul_bias_act(rep, params["fc7"], act="relu")
    preds = matmul_bias_act(rep, params["predictor"])                 # fused cls+bbox
    cls_logits = preds[:, :NUM_CLASSES]
    box_deltas = preds[:, NUM_CLASSES:]

    return {
        "features": fpn_nchw,
        "rpn_cls_logits": rpn_cls,
        "rpn_bbox_pred": rpn_bbox,
        "proposals": boxes,
        "roi_cls_logits": cls_logits,       # (N*5, num_classes=5)
        "roi_bbox_deltas": box_deltas,      # (N*5, num_classes*4=20)
    }


# ----------------------------------------------------------------------------
if __name__ == "__main__":
    key = jax.random.PRNGKey(0)
    pkey, xkey = jax.random.split(key)
    params = build_params(pkey)
    x = jax.random.uniform(xkey, (2, 3, 32, 32), jnp.float32)

    out = forward(params, x)
    jax.tree_util.tree_map(lambda a: a.block_until_ready(), out)
    print("KERNEL_OK")
</pallas_src>

<mosaic_0001>
module attributes {stable_mosaic.version = 11 : i64} {
  func.func @_affine_kernel(%arg0: i32, %arg1: memref<8x1024xf32, #tpu.memory_space<vmem>>, %arg2: memref<8x1xf32, #tpu.memory_space<vmem>>, %arg3: memref<8x1xf32, #tpu.memory_space<vmem>>, %arg4: memref<8x1024xf32, #tpu.memory_space<vmem>>) attributes {dimension_semantics = [#tpu.dimension_semantics<arbitrary>], iteration_bounds = array<i64: 1>, scalar_prefetch = 0 : i64, scratch_operands = 0 : i64, tpu.core_type = #tpu.core_type<tc>, window_params = [{transform_indices = @transform_0, window_bounds = array<i64: 8, 1024>}, {pipeline_mode = #tpu.pipeline_mode<synchronous>, transform_indices = @transform_1, window_bounds = array<i64: 8, 1>}, {pipeline_mode = #tpu.pipeline_mode<synchronous>, transform_indices = @transform_2, window_bounds = array<i64: 8, 1>}, {transform_indices = @transform_3, window_bounds = array<i64: 8, 1024>}]} {
    %c0 = arith.constant 0 : index
    %c0_0 = arith.constant 0 : index
    %0 = vector.load %arg1[%c0, %c0_0] : memref<8x1024xf32, #tpu.memory_space<vmem>>, vector<8x1024xf32>
    %c0_1 = arith.constant 0 : index
    %c0_2 = arith.constant 0 : index
    %1 = vector.load %arg2[%c0_1, %c0_2] : memref<8x1xf32, #tpu.memory_space<vmem>>, vector<8x1xf32>
    %2 = vector.broadcast %1 : vector<8x1xf32> to vector<8x1024xf32>
    %3 = arith.mulf %0, %2 : vector<8x1024xf32>
    %c0_3 = arith.constant 0 : index
    %c0_4 = arith.constant 0 : index
    %4 = vector.load %arg3[%c0_3, %c0_4] : memref<8x1xf32, #tpu.memory_space<vmem>>, vector<8x1xf32>
    %5 = vector.broadcast %4 : vector<8x1xf32> to vector<8x1024xf32>
    %6 = arith.addf %3, %5 : vector<8x1024xf32>
    %c0_5 = arith.constant 0 : index
    %c0_6 = arith.constant 0 : index
    %7 = vector.load %arg4[%c0_5, %c0_6] : memref<8x1024xf32, #tpu.memory_space<vmem>>, vector<8x1024xf32>
    tpu.vector_store %arg4[%c0_5, %c0_6], %6 {strides = array<i32>} : memref<8x1024xf32, #tpu.memory_space<vmem>>, vector<8x1024xf32>,
    return
  }
  func.func @transform_0(%arg0: i32) -> (i32, i32) {
    %c0_i32 = arith.constant 0 : i32
    %c0_i32_0 = arith.constant 0 : i32
    return %c0_i32, %arg0 : i32, i32
  }
  func.func @transform_1(%arg0: i32) -> (i32, i32) {
    %c0_i32 = arith.constant 0 : i32
    %c0_i32_0 = arith.constant 0 : i32
    %c0_i32_1 = arith.constant 0 : i32
    return %c0_i32, %c0_i32_0 : i32, i32
  }
  func.func @transform_2(%arg0: i32) -> (i32, i32) {
    %c0_i32 = arith.constant 0 : i32
    %c0_i32_0 = arith.constant 0 : i32
    %c0_i32_1 = arith.constant 0 : i32
    return %c0_i32, %c0_i32_0 : i32, i32
  }
  func.func @transform_3(%arg0: i32) -> (i32, i32) {
    %c0_i32 = arith.constant 0 : i32
    %c0_i32_0 = arith.constant 0 : i32
    return %c0_i32, %arg0 : i32, i32
  }
}

</mosaic_0001>

<llo_original>
// kernel: tpu_custom_call.1
$region0: #{tpu_custom_call.1}
  #allocation0 [shape = 'u32[]', space=smem, size = 0x4, offset = 0x4, fixed_abs, tag = 'smem constant byte address 0x4 - core index']
  #allocation1 [shape = 'u32[144,128]{1,0:T(1,128)}', space=vmem, size = 0x12000, scoped, tag = 'internal scratch']
  %s0 = inlined_call_operand.hbm [shape: f32[8,1024], index: 0, kind: input, shape index: {}]
  %s1 = inlined_call_operand.vmem [shape: f32[8,1], index: 1, kind: input, shape index: {}]
  %s2 = inlined_call_operand.vmem [shape: f32[8,1], index: 2, kind: input, shape index: {}]
  %s3 = inlined_call_operand.hbm [shape: f32[8,1024], index: 3, kind: output, shape index: {}]
  %s4 = sld [smem:[#allocation0]]
  $region26: #{tpu_custom_call.1} parent=0
    _
  %s6 = ssub.s32 1, %s4
  %s7 = scalar_select 0, %s6, %s4
  $region1: #{tpu_custom_call.1} parent=0
    #allocation2 [shape = 'u8[32768]{0}', space=vmem, size = 0x8000, scoped, tag = 'input window, operand 0, single buffered']
    #allocation3 [shape = 's32[1]{0}', space=sflag, size = 0x4, scoped, tag = 'scoped memory for tpu_custom_call.1']
    #allocation4 [shape = 's32[1]{0}', space=sflag, size = 0x4, scoped, tag = 'scoped memory for tpu_custom_call.1']
    #allocation5 [shape = 'u8[32768]{0}', space=vmem, size = 0x8000, scoped, tag = 'output window, operand 0, single buffered']
    %8 = vsyncpa [#allocation3], 0
    %9 = vsyncpa [#allocation4], 0
    // Predicated region
    $region2: #{tpu_custom_call.1} parent=1 // pred_check
      _
    $region3: #{tpu_custom_call.1} parent=1 // pred_check_branch
      %11 = sbr.rel (0) target = $region5
    $region4: #{tpu_custom_call.1} parent=1 // pred_region
      %s13 = ssub.s32 1024, 1024
      %14 = vsyncadd [#allocation3], %s13
      %s16 = sshll.u32 [#allocation2], 4
      %s17 = int_to_ptr.vmem [resolvable:$true] %s16
      %19 = dma.hbm_to_vmem [thread:$0]  %s0, 1024, %s17, [#allocation3]
    $region5: #{tpu_custom_call.1} parent=1 // pred_fallthru
      _
    // Predicated region
    $region6: #{tpu_custom_call.1} parent=1 // pred_check
      _
    $region7: #{tpu_custom_call.1} parent=1 // pred_check_branch
      %21 = sbr.rel (0) target = $region9
    $region8: #{tpu_custom_call.1} parent=1 // pred_region
      _
    $region9: #{tpu_custom_call.1} parent=1 // pred_fallthru
      _
    // Predicated region
    $region10: #{tpu_custom_call.1} parent=1 // pred_check
      _
    $region11: #{tpu_custom_call.1} parent=1 // pred_check_branch
      %23 = sbr.rel (0) target = $region13
    $region12: #{tpu_custom_call.1} parent=1 // pred_region
      _
    $region13: #{tpu_custom_call.1} parent=1 // pred_fallthru
      _
    // Predicated region
    $region14: #{tpu_custom_call.1} parent=1 // pred_check
      _
    $region15: #{tpu_custom_call.1} parent=1 // pred_check_branch
      %25 = sbr.rel (0) target = $region17
    $region16: #{tpu_custom_call.1} parent=1 // pred_region
      %26 = dma.done [#allocation3], 1024
    $region17: #{tpu_custom_call.1} parent=1 // pred_fallthru
      _
    %v27 = vld [vmem:[#allocation2] sm:$0xff]
    %v28 = vld [vmem:[#allocation2 + $0x8] sm:$0xff]
    %v29 = vld [vmem:[#allocation2 + $0x10] sm:$0xff]
    %v30 = vld [vmem:[#allocation2 + $0x18] sm:$0xff]
    %v31 = vld [vmem:[#allocation2 + $0x20] sm:$0xff]
    %v32 = vld [vmem:[#allocation2 + $0x28] sm:$0xff]
    %v33 = vld [vmem:[#allocation2 + $0x30] sm:$0xff]
    %v34 = vld [vmem:[#allocation2 + $0x38] sm:$0xff]
    %v35 = vld [vmem:[%s1] sm:$0xff]
    %37 = vset.pattern.permute.xlu0 0
    %38 = vperm.xlu0 %37, %v35
    %v39 = vpop.permute.xlu0 %38
    %v41 = vmul.f32 %v27, %v39
    %v42 = vmul.f32 %v28, %v39
    %v43 = vmul.f32 %v29, %v39
    %v44 = vmul.f32 %v30, %v39
    %v45 = vmul.f32 %v31, %v39
    %v46 = vmul.f32 %v32, %v39
    %v47 = vmul.f32 %v33, %v39
    %v48 = vmul.f32 %v34, %v39
    %v49 = vld [vmem:[%s2] sm:$0xff]
    %51 = vset.pattern.permute.xlu0 0
    %52 = vperm.xlu0 %51, %v49
    %v53 = vpop.permute.xlu0 %52
    %v55 = vadd.f32 %v41, %v53
    %v56 = vadd.f32 %v42, %v53
    %v57 = vadd.f32 %v43, %v53
    %v58 = vadd.f32 %v44, %v53
    %v59 = vadd.f32 %v45, %v53
    %v60 = vadd.f32 %v46, %v53
    %v61 = vadd.f32 %v47, %v53
    %v62 = vadd.f32 %v48, %v53
    %63 = vst [vmem:[#allocation5] sm:$0xff] %v55
    %64 = vst [vmem:[#allocation5 + $0x8] sm:$0xff] %v56
    %65 = vst [vmem:[#allocation5 + $0x10] sm:$0xff] %v57
    %66 = vst [vmem:[#allocation5 + $0x18] sm:$0xff] %v58
    %67 = vst [vmem:[#allocation5 + $0x20] sm:$0xff] %v59
    %68 = vst [vmem:[#allocation5 + $0x28] sm:$0xff] %v60
    %69 = vst [vmem:[#allocation5 + $0x30] sm:$0xff] %v61
    %70 = vst [vmem:[#allocation5 + $0x38] sm:$0xff] %v62
    // Predicated region
    $region18: #{tpu_custom_call.1} parent=1 // pred_check
      _
    $region19: #{tpu_custom_call.1} parent=1 // pred_check_branch
      %72 = sbr.rel (0) target = $region21
    $region20: #{tpu_custom_call.1} parent=1 // pred_region
      %s74 = ssub.s32 1024, 1024
      %75 = vsyncadd [#allocation4], %s74
      %s77 = sshll.u32 [#allocation5], 4
      %s78 = int_to_ptr.vmem [resolvable:$true] %s77
      %80 = dma.vmem_to_hbm [thread:$0]  %s78, 1024, %s3, [#allocation4]
    $region21: #{tpu_custom_call.1} parent=1 // pred_fallthru
      _
    // Predicated region
    $region22: #{tpu_custom_call.1} parent=1 // pred_check
      _
    $region23: #{tpu_custom_call.1} parent=1 // pred_check_branch
      %82 = sbr.rel (0) target = $region25
    $region24: #{tpu_custom_call.1} parent=1 // pred_region
      %83 = dma.done [#allocation4], 1024
    $region25: #{tpu_custom_call.1} parent=1 // pred_fallthru
      _
    %84 = vsyncpa [#allocation3], 1
    %85 = vsyncpa [#allocation4], 1

</llo_original>
